<compile_context>
chip_gen: v7x
topology: tpu7x:2x2x1
jax: 0.10.0
libtpu: 0.0.40
codegen_flags: <defaults>
</compile_context>

<pallas_src>
import jax
import jax.numpy as jnp
from jax import lax
from jax.experimental import pallas as pl
from jax.experimental.pallas import tpu as pltpu


def dgvae_kernel(x_ref, w1_ref, b1_ref, wml_ref, bml_ref, eps_ref,
                 pred_ref, mu_ref, sigma_ref):
    L = mu_ref.shape[-1]

    # ---- encoder (fused mu / log_sigma projection) ----
    x = x_ref[...]
    h = jnp.dot(x, w1_ref[...], preferred_element_type=jnp.float32) + b1_ref[...]
    h = jnp.maximum(h, 0.0)                                      # ReLU
    stats = jnp.dot(h, wml_ref[...], preferred_element_type=jnp.float32) + bml_ref[...]
    mu = stats[:, :L]
    log_sigma = stats[:, L:]

    # ---- reparameterization (std = exp(0.5*ls), no sqrt-of-exp chain) ----
    sigma = jnp.exp(log_sigma)
    std = jnp.exp(0.5 * log_sigma)
    z = mu + std * eps_ref[...]

    # ---- softmax over the node axis (dim=0), reference semantics ----
    z_max = jnp.max(z, axis=0, keepdims=True)
    e = jnp.exp(z - z_max)
    denom = jnp.sum(e, axis=0, keepdims=True)
    sample = e * pl.reciprocal(denom, approx=True)

    # ---- inner-product decoder: contract over latent axis (no transpose) ----
    logits = lax.dot_general(sample, sample,
                             dimension_numbers=(((1,), (1,)), ((), ())),
                             preferred_element_type=jnp.float32)
    pred_ref[...] = pl.reciprocal(1.0 + jnp.exp(-logits), approx=True)  # sigmoid

    mu_ref[...] = mu
    sigma_ref[...] = sigma


def dgvae_forward(x, params, eps):
    """x: [B, N, F], eps: [B, N, L] -> (pred [B,N,N], mu [B,N,L], sigma [B,N,L])."""
    B, N, F = x.shape
    H = params["w1"].shape[1]
    L = params["wmu"].shape[1]

    # Fuse mu / log_sigma weights into one [H, 2L] projection.
    w_mulog = jnp.concatenate([params["wmu"], params["wls"]], axis=1)
    b_mulog = jnp.concatenate([params["bmu"], params["bls"]], axis=1)

    grid = (B,)
    in_specs = [
        pl.BlockSpec((None, N, F), lambda b: (b, 0, 0)),   # x      (per-graph)
        pl.BlockSpec((F, H), lambda b: (0, 0)),            # w1     (shared)
        pl.BlockSpec((1, H), lambda b: (0, 0)),            # b1     (shared)
        pl.BlockSpec((H, 2 * L), lambda b: (0, 0)),        # w_mulog (shared)
        pl.BlockSpec((1, 2 * L), lambda b: (0, 0)),        # b_mulog (shared)
        pl.BlockSpec((None, N, L), lambda b: (b, 0, 0)),   # eps    (per-graph)
    ]
    out_specs = (
        pl.BlockSpec((None, N, N), lambda b: (b, 0, 0)),   # pred
        pl.BlockSpec((None, N, L), lambda b: (b, 0, 0)),   # mu
        pl.BlockSpec((None, N, L), lambda b: (b, 0, 0)),   # sigma
    )

    return pl.pallas_call(
        dgvae_kernel,
        grid=grid,
        in_specs=in_specs,
        out_specs=out_specs,
        out_shape=(
            jax.ShapeDtypeStruct((B, N, N), jnp.float32),
            jax.ShapeDtypeStruct((B, N, L), jnp.float32),
            jax.ShapeDtypeStruct((B, N, L), jnp.float32),
        ),
        compiler_params=pltpu.CompilerParams(
            dimension_semantics=("parallel",)),
    )(x, params["w1"], params["b1"], w_mulog, b_mulog, eps)


def init_params(key, F, H, L):
    k1, k2, k3 = jax.random.split(key, 3)
    scale1 = 1.0 / jnp.sqrt(F)
    scale2 = 1.0 / jnp.sqrt(H)
    return {
        "w1":  jax.random.normal(k1, (F, H), jnp.float32) * scale1,
        "b1":  jnp.zeros((1, H), jnp.float32),
        "wmu": jax.random.normal(k2, (H, L), jnp.float32) * scale2,
        "bmu": jnp.zeros((1, L), jnp.float32),
        "wls": jax.random.normal(k3, (H, L), jnp.float32) * scale2,
        "bls": jnp.zeros((1, L), jnp.float32),
    }


def dgvae_reference(x, params, eps):
    def single(xg, epsg):
        h = jnp.maximum(xg @ params["w1"] + params["b1"], 0.0)
        mu = h @ params["wmu"] + params["bmu"]
        ls = h @ params["wls"] + params["bls"]
        sigma = jnp.exp(ls)
        z = mu + jnp.sqrt(sigma) * epsg
        sample = jax.nn.softmax(z, axis=0)
        pred = jax.nn.sigmoid(sample @ sample.T)
        return pred, mu, sigma
    return jax.vmap(single)(x, eps)


if __name__ == "__main__":
    B, N, F, H, L = 4, 8, 16, 32, 16  # graphs, nodes, features, hidden, latent

    key = jax.random.PRNGKey(0)
    kx, kp, ke = jax.random.split(key, 3)

    x = jax.random.normal(kx, (B, N, F), jnp.float32)
    params = init_params(kp, F, H, L)
    eps = jax.random.normal(ke, (B, N, L), jnp.float32)  # eps = randn_like(mu_0)

    pred, mu, sigma = dgvae_forward(x, params, eps)
    jax.block_until_ready((pred, mu, sigma))

    assert pred.shape == (B, N, N) and mu.shape == (B, N, L) and sigma.shape == (B, N, L)

    # Numerical check vs. pure-JAX reference (loose tolerance: approx reciprocal).
    pred_r, mu_r, sigma_r = dgvae_reference(x, params, eps)
    assert jnp.allclose(mu, mu_r, atol=1e-4, rtol=1e-4)
    assert jnp.allclose(sigma, sigma_r, atol=1e-4, rtol=1e-4)
    assert jnp.allclose(pred, pred_r, atol=5e-3, rtol=5e-3)

    print("KERNEL_OK")
</pallas_src>

<mosaic_0001>
module attributes {stable_mosaic.version = 11 : i64} {
  func.func @dgvae_kernel(%arg0: i32, %arg1: memref<1x8x16xf32, #tpu.memory_space<vmem>>, %arg2: memref<16x32xf32, #tpu.memory_space<vmem>>, %arg3: memref<1x32xf32, #tpu.memory_space<vmem>>, %arg4: memref<32x32xf32, #tpu.memory_space<vmem>>, %arg5: memref<1x32xf32, #tpu.memory_space<vmem>>, %arg6: memref<1x8x16xf32, #tpu.memory_space<vmem>>, %arg7: memref<1x8x8xf32, #tpu.memory_space<vmem>>, %arg8: memref<1x8x16xf32, #tpu.memory_space<vmem>>, %arg9: memref<1x8x16xf32, #tpu.memory_space<vmem>>) attributes {dimension_semantics = [#tpu.dimension_semantics<parallel>], iteration_bounds = array<i64: 4>, scalar_prefetch = 0 : i64, scratch_operands = 0 : i64, tpu.core_type = #tpu.core_type<tc>, window_params = [{transform_indices = @transform_0, window_bounds = array<i64: 1, 8, 16>}, {pipeline_mode = #tpu.pipeline_mode<synchronous>, transform_indices = @transform_1, window_bounds = array<i64: 16, 32>}, {pipeline_mode = #tpu.pipeline_mode<synchronous>, transform_indices = @transform_2, window_bounds = array<i64: 1, 32>}, {pipeline_mode = #tpu.pipeline_mode<synchronous>, transform_indices = @transform_3, window_bounds = array<i64: 32, 32>}, {pipeline_mode = #tpu.pipeline_mode<synchronous>, transform_indices = @transform_4, window_bounds = array<i64: 1, 32>}, {transform_indices = @transform_5, window_bounds = array<i64: 1, 8, 16>}, {transform_indices = @transform_6, window_bounds = array<i64: 1, 8, 8>}, {transform_indices = @transform_7, window_bounds = array<i64: 1, 8, 16>}, {transform_indices = @transform_8, window_bounds = array<i64: 1, 8, 16>}]} {
    %c0 = arith.constant 0 : index
    %c0_0 = arith.constant 0 : index
    %c0_1 = arith.constant 0 : index
    %0 = vector.load %arg1[%c0, %c0_0, %c0_1] : memref<1x8x16xf32, #tpu.memory_space<vmem>>, vector<1x8x16xf32>
    %1 = vector.shape_cast %0 : vector<1x8x16xf32> to vector<8x16xf32>
    %c0_2 = arith.constant 0 : index
    %c0_3 = arith.constant 0 : index
    %2 = vector.load %arg2[%c0_2, %c0_3] : memref<16x32xf32, #tpu.memory_space<vmem>>, vector<16x32xf32>
    %cst = arith.constant dense<0.000000e+00> : vector<8x32xf32>
    %3 = tpu.matmul %1, %2, %cst {dimension_numbers = #tpu.dot_dimension_numbers<[1], [0], [0], [1], [0, 0, 1, 1], [], []>} : vector<8x16xf32>, vector<16x32xf32>, vector<8x32xf32> -> vector<8x32xf32>
    %c0_4 = arith.constant 0 : index
    %c0_5 = arith.constant 0 : index
    %4 = vector.load %arg3[%c0_4, %c0_5] : memref<1x32xf32, #tpu.memory_space<vmem>>, vector<1x32xf32>
    %5 = vector.broadcast %4 : vector<1x32xf32> to vector<8x32xf32>
    %6 = arith.addf %3, %5 : vector<8x32xf32>
    %cst_6 = arith.constant 0.000000e+00 : f32
    %7 = vector.broadcast %cst_6 : f32 to vector<8x32xf32>
    %8 = arith.maximumf %6, %7 : vector<8x32xf32>
    %c0_7 = arith.constant 0 : index
    %c0_8 = arith.constant 0 : index
    %9 = vector.load %arg4[%c0_7, %c0_8] : memref<32x32xf32, #tpu.memory_space<vmem>>, vector<32x32xf32>
    %cst_9 = arith.constant dense<0.000000e+00> : vector<8x32xf32>
    %10 = tpu.matmul %8, %9, %cst_9 {dimension_numbers = #tpu.dot_dimension_numbers<[1], [0], [0], [1], [0, 0, 1, 1], [], []>} : vector<8x32xf32>, vector<32x32xf32>, vector<8x32xf32> -> vector<8x32xf32>
    %c0_10 = arith.constant 0 : index
    %c0_11 = arith.constant 0 : index
    %11 = vector.load %arg5[%c0_10, %c0_11] : memref<1x32xf32, #tpu.memory_space<vmem>>, vector<1x32xf32>
    %12 = vector.broadcast %11 : vector<1x32xf32> to vector<8x32xf32>
    %13 = arith.addf %10, %12 : vector<8x32xf32>
    %14 = vector.extract_strided_slice %13 {offsets = [0, 0], sizes = [8, 16], strides = [1, 1]} : vector<8x32xf32> to vector<8x16xf32>
    %15 = vector.extract_strided_slice %13 {offsets = [0, 16], sizes = [8, 16], strides = [1, 1]} : vector<8x32xf32> to vector<8x16xf32>
    %16 = math.exp %15 : vector<8x16xf32>
    %cst_12 = arith.constant 5.000000e-01 : f32
    %17 = vector.broadcast %cst_12 : f32 to vector<8x16xf32>
    %18 = arith.mulf %17, %15 : vector<8x16xf32>
    %19 = math.exp %18 : vector<8x16xf32>
    %c0_13 = arith.constant 0 : index
    %c0_14 = arith.constant 0 : index
    %c0_15 = arith.constant 0 : index
    %20 = vector.load %arg6[%c0_13, %c0_14, %c0_15] : memref<1x8x16xf32, #tpu.memory_space<vmem>>, vector<1x8x16xf32>
    %21 = vector.shape_cast %20 : vector<1x8x16xf32> to vector<8x16xf32>
    %22 = arith.mulf %19, %21 : vector<8x16xf32>
    %23 = arith.addf %14, %22 : vector<8x16xf32>
    %cst_16 = arith.constant dense<0xFF800000> : vector<16xf32>
    %24 = vector.multi_reduction <maximumf>, %23, %cst_16 [0] : vector<8x16xf32> to vector<16xf32>
    %25 = vector.shape_cast %24 : vector<16xf32> to vector<1x16xf32>
    %26 = vector.broadcast %25 : vector<1x16xf32> to vector<8x16xf32>
    %27 = arith.subf %23, %26 : vector<8x16xf32>
    %28 = math.exp %27 : vector<8x16xf32>
    %cst_17 = arith.constant dense<0.000000e+00> : vector<16xf32>
    %29 = vector.multi_reduction <add>, %28, %cst_17 [0] : vector<8x16xf32> to vector<16xf32>
    %30 = vector.shape_cast %29 : vector<16xf32> to vector<1x16xf32>
    %31 = tpu.reciprocal %30 {approx = true} : vector<1x16xf32> -> vector<1x16xf32>
    %32 = vector.broadcast %31 : vector<1x16xf32> to vector<8x16xf32>
    %33 = arith.mulf %28, %32 : vector<8x16xf32>
    %cst_18 = arith.constant dense<0.000000e+00> : vector<8x8xf32>
    %34 = tpu.matmul %33, %33, %cst_18 {dimension_numbers = #tpu.dot_dimension_numbers<[1], [1], [0], [0], [0, 0, 1, 0], [], []>} : vector<8x16xf32>, vector<8x16xf32>, vector<8x8xf32> -> vector<8x8xf32>
    %cst_19 = arith.constant 0.000000e+00 : f32
    %35 = vector.broadcast %cst_19 : f32 to vector<8x8xf32>
    %36 = arith.subf %35, %34 : vector<8x8xf32>
    %37 = math.exp %36 : vector<8x8xf32>
    %cst_20 = arith.constant 1.000000e+00 : f32
    %38 = vector.broadcast %cst_20 : f32 to vector<8x8xf32>
    %39 = arith.addf %38, %37 : vector<8x8xf32>
    %40 = tpu.reciprocal %39 {approx = true} : vector<8x8xf32> -> vector<8x8xf32>
    %c0_21 = arith.constant 0 : index
    %c0_22 = arith.constant 0 : index
    %c0_23 = arith.constant 0 : index
    %41 = vector.load %arg7[%c0_21, %c0_22, %c0_23] : memref<1x8x8xf32, #tpu.memory_space<vmem>>, vector<1x8x8xf32>
    %42 = vector.shape_cast %41 : vector<1x8x8xf32> to vector<8x8xf32>
    %43 = vector.shape_cast %40 : vector<8x8xf32> to vector<1x8x8xf32>
    tpu.vector_store %arg7[%c0_21, %c0_22, %c0_23], %43 {strides = array<i32>} : memref<1x8x8xf32, #tpu.memory_space<vmem>>, vector<1x8x8xf32>,
    %c0_24 = arith.constant 0 : index
    %c0_25 = arith.constant 0 : index
    %c0_26 = arith.constant 0 : index
    %44 = vector.load %arg8[%c0_24, %c0_25, %c0_26] : memref<1x8x16xf32, #tpu.memory_space<vmem>>, vector<1x8x16xf32>
    %45 = vector.shape_cast %44 : vector<1x8x16xf32> to vector<8x16xf32>
    %46 = vector.shape_cast %14 : vector<8x16xf32> to vector<1x8x16xf32>
    tpu.vector_store %arg8[%c0_24, %c0_25, %c0_26], %46 {strides = array<i32>} : memref<1x8x16xf32, #tpu.memory_space<vmem>>, vector<1x8x16xf32>,
    %c0_27 = arith.constant 0 : index
    %c0_28 = arith.constant 0 : index
    %c0_29 = arith.constant 0 : index
    %47 = vector.load %arg9[%c0_27, %c0_28, %c0_29] : memref<1x8x16xf32, #tpu.memory_space<vmem>>, vector<1x8x16xf32>
    %48 = vector.shape_cast %47 : vector<1x8x16xf32> to vector<8x16xf32>
    %49 = vector.shape_cast %16 : vector<8x16xf32> to vector<1x8x16xf32>
    tpu.vector_store %arg9[%c0_27, %c0_28, %c0_29], %49 {strides = array<i32>} : memref<1x8x16xf32, #tpu.memory_space<vmem>>, vector<1x8x16xf32>,
    return
  }
  func.func @transform_0(%arg0: i32) -> (i32, i32, i32) {
    %c0_i32 = arith.constant 0 : i32
    %c0_i32_0 = arith.constant 0 : i32
    %c0_i32_1 = arith.constant 0 : i32
    return %arg0, %c0_i32, %c0_i32_0 : i32, i32, i32
  }
  func.func @transform_1(%arg0: i32) -> (i32, i32) {
    %c0_i32 = arith.constant 0 : i32
    %c0_i32_0 = arith.constant 0 : i32
    %c0_i32_1 = arith.constant 0 : i32
    return %c0_i32, %c0_i32_0 : i32, i32
  }
  func.func @transform_2(%arg0: i32) -> (i32, i32) {
    %c0_i32 = arith.constant 0 : i32
    %c0_i32_0 = arith.constant 0 : i32
    %c0_i32_1 = arith.constant 0 : i32
    return %c0_i32, %c0_i32_0 : i32, i32
  }
  func.func @transform_3(%arg0: i32) -> (i32, i32) {
    %c0_i32 = arith.constant 0 : i32
    %c0_i32_0 = arith.constant 0 : i32
    %c0_i32_1 = arith.constant 0 : i32
    return %c0_i32, %c0_i32_0 : i32, i32
  }
  func.func @transform_4(%arg0: i32) -> (i32, i32) {
    %c0_i32 = arith.constant 0 : i32
    %c0_i32_0 = arith.constant 0 : i32
    %c0_i32_1 = arith.constant 0 : i32
    return %c0_i32, %c0_i32_0 : i32, i32
  }
  func.func @transform_5(%arg0: i32) -> (i32, i32, i32) {
    %c0_i32 = arith.constant 0 : i32
    %c0_i32_0 = arith.constant 0 : i32
    %c0_i32_1 = arith.constant 0 : i32
    return %arg0, %c0_i32, %c0_i32_0 : i32, i32, i32
  }
  func.func @transform_6(%arg0: i32) -> (i32, i32, i32) {
    %c0_i32 = arith.constant 0 : i32
    %c0_i32_0 = arith.constant 0 : i32
    %c0_i32_1 = arith.constant 0 : i32
    return %arg0, %c0_i32, %c0_i32_0 : i32, i32, i32
  }
  func.func @transform_7(%arg0: i32) -> (i32, i32, i32) {
    %c0_i32 = arith.constant 0 : i32
    %c0_i32_0 = arith.constant 0 : i32
    %c0_i32_1 = arith.constant 0 : i32
    return %arg0, %c0_i32, %c0_i32_0 : i32, i32, i32
  }
  func.func @transform_8(%arg0: i32) -> (i32, i32, i32) {
    %c0_i32 = arith.constant 0 : i32
    %c0_i32_0 = arith.constant 0 : i32
    %c0_i32_1 = arith.constant 0 : i32
    return %arg0, %c0_i32, %c0_i32_0 : i32, i32, i32
  }
}

</mosaic_0001>

<llo_original>
// kernel: tpu_custom_call.1
$region0: #{tpu_custom_call.1}
  #allocation0 [shape = 'u32[]', space=smem, size = 0x4, offset = 0x4, fixed_abs, tag = 'smem constant byte address 0x4 - core index']
  #allocation1 [shape = 'u32[144,128]{1,0:T(1,128)}', space=vmem, size = 0x12000, scoped, tag = 'internal scratch']
  %s0 = inlined_call_operand.hbm [shape: f32[4,8,16], index: 0, kind: input, shape index: {}]
  %s1 = inlined_call_operand.hbm [shape: f32[16,32], index: 1, kind: input, shape index: {}]
  %s2 = inlined_call_operand.vmem [shape: f32[1,32], index: 2, kind: input, shape index: {}]
  %s3 = inlined_call_operand.hbm [shape: f32[32,32], index: 3, kind: input, shape index: {}]
  %s4 = inlined_call_operand.vmem [shape: f32[1,32], index: 4, kind: input, shape index: {}]
  %s5 = inlined_call_operand.hbm [shape: f32[4,8,16], index: 5, kind: input, shape index: {}]
  %s6 = inlined_call_operand.hbm [shape: f32[4,8,8], index: 6, kind: output, shape index: {0}]
  %s7 = inlined_call_operand.hbm [shape: f32[4,8,16], index: 7, kind: output, shape index: {1}]
  %s8 = inlined_call_operand.hbm [shape: f32[4,8,16], index: 8, kind: output, shape index: {2}]
  %9 = xla_tuple %s6, %s7, %s8
  %s10 = sld [smem:[#allocation0]]
  $region89: #{tpu_custom_call.1} parent=0
    _
  %s12 = ssub.s32 1, %s10
  %s13 = scalar_select 0, %s12, %s10
  $region1: #{tpu_custom_call.1} parent=0
    #allocation2 [shape = 'u8[8192]{0}', space=vmem, size = 0x2000, scoped, tag = 'input window, operand 0']
    #allocation3 [shape = 's32[2]{0}', space=sflag, size = 0x8, scoped, tag = 'scoped memory for tpu_custom_call.1']
    #allocation4 [shape = 's32[2]{0}', space=sflag, size = 0x8, scoped, tag = 'scoped memory for tpu_custom_call.1']
    #allocation5 [shape = 'u8[8192]{0}', space=vmem, size = 0x2000, scoped, tag = 'input window, operand 1, single buffered']
    #allocation6 [shape = 's32[1]{0}', space=sflag, size = 0x4, scoped, tag = 'scoped memory for tpu_custom_call.1']
    #allocation7 [shape = 'u8[16384]{0}', space=vmem, size = 0x4000, scoped, tag = 'input window, operand 3, single buffered']
    #allocation8 [shape = 'u8[8192]{0}', space=vmem, size = 0x2000, scoped, tag = 'input window, operand 5']
    #allocation9 [shape = 's32[2]{0}', space=sflag, size = 0x8, scoped, tag = 'scoped memory for tpu_custom_call.1']
    #allocation10 [shape = 'u8[8192]{0}', space=vmem, size = 0x2000, scoped, tag = 'output window, operand 0']
    #allocation11 [shape = 'u8[8192]{0}', space=vmem, size = 0x2000, scoped, tag = 'output window, operand 1']
    #allocation12 [shape = 's32[2]{0}', space=sflag, size = 0x8, scoped, tag = 'scoped memory for tpu_custom_call.1']
    #allocation13 [shape = 'u8[8192]{0}', space=vmem, size = 0x2000, scoped, tag = 'output window, operand 2']
    %14 = vsyncpa [#allocation3], 0
    %s15 = scalar_lea.sflag [#allocation3], 1
    %16 = vsyncpa %s15, 0
    %17 = vsyncpa [#allocation6], 0
    %18 = vsyncpa [#allocation9], 0
    %s19 = scalar_lea.sflag [#allocation9], 1
    %20 = vsyncpa %s19, 0
    %21 = vsyncpa [#allocation4], 0
    %s22 = scalar_lea.sflag [#allocation4], 1
    %23 = vsyncpa %s22, 0
    %24 = vsyncpa [#allocation12], 0
    %s25 = scalar_lea.sflag [#allocation12], 1
    %26 = vsyncpa %s25, 0
    loop: start=0, step=1, limit=6
    $region2: #{tpu_custom_call.1} parent=1 // loop_pre_header
      _
    $region3: #{tpu_custom_call.1} parent=1 // loop_header
      %s28 = sphi 0, %s32
      %p29 = scmp.ge.s32.totalorder %s28, 6
      %s38 = sphi 0, %s40
      %s41 = sphi 0, %s38
      %s42 = sphi 0, %s41
      %s58 = sphi 0, %s42
      %s62 = sphi 0, %s62
      %s64 = sphi 0, %s62
      %s65 = sphi 0, %s64
      %s79 = sphi 0, %s65
      %s83 = sphi 0, %s83
      %s85 = sphi 0, %s83
      %s86 = sphi 0, %s85
      %s100 = sphi 0, %s86
      %s104 = sphi 0, %s104
      %s106 = sphi 0, %s104
      %s107 = sphi 0, %s106
      %s121 = sphi 0, %s107
      %s125 = sphi 0, %s125
      %s127 = sphi 0, %s125
      %s128 = sphi 0, %s127
      %s142 = sphi 0, %s128
      %s148 = sphi 0, %s150
      %s151 = sphi 0, %s148
      %s152 = sphi 0, %s151
      %s168 = sphi 0, %s152
      %s174 = sphi 0, %s176
      %s177 = sphi 0, %s174
      %s178 = sphi 0, %s177
      %s194 = sphi 0, %s178
      %s200 = sphi 0, %s202
      %s203 = sphi 0, %s200
      %s204 = sphi 0, %s203
      %s220 = sphi 0, %s204
      %s226 = sphi 0, %s228
      %s229 = sphi 0, %s226
      %s230 = sphi 0, %s229
      %s246 = sphi 0, %s230
    $region4: #{tpu_custom_call.1} parent=1 // loop_header_branch
      %31 = sbr.rel (%p29) target = $region8
    $region5: #{tpu_custom_call.1} parent=1 // loop_body
      %s33 = ssub.s32 %s28, 1
      %s34 = ssub.s32 %s28, 2
      %s35 = sadd.s32 %s28, 1
      %s36 = ssub.s32 %s28, %s35
      %p37 = scmp.eq.s32.totalorder %s36, 0
      %s39 = sadd.s32 %s38, 1
      %s40 = scalar_select %p37, %s38, %s39
      %p43 = pneg %p37
      %p44 = scmp.eq.s32.totalorder %s28, 3
      %p45 = por %p43, %p44
      %p46 = scmp.ne.s32.totalorder %s38, %s41
      %p47 = scmp.eq.s32.totalorder %s28, 0
      %p48 = por %p46, %p47
      %p49 = scmp.ne.s32.totalorder %s38, %s41
      %p50 = scmp.eq.s32.totalorder %s33, 3
      %p51 = por %p49, %p50
      %p52 = scmp.ne.s32.totalorder %s41, %s42
      %p53 = scmp.eq.s32.totalorder %s33, 0
      %p54 = por %p52, %p53
      %p55 = scmp.ne.s32.totalorder %s41, %s42
      %p56 = scmp.eq.s32.totalorder %s34, 3
      %p57 = por %p55, %p56
      %p59 = scmp.ne.s32.totalorder %s42, %s58
      %p60 = scmp.eq.s32.totalorder %s34, 0
      %p61 = por %p59, %p60
      %s63 = sadd.s32 %s62, 1
      %p66 = scmp.eq.s32.totalorder %s28, 3
      %p67 = scmp.ne.s32.totalorder %s62, %s64
      %p68 = scmp.eq.s32.totalorder %s28, 0
      %p69 = por %p67, %p68
      %p70 = scmp.ne.s32.totalorder %s62, %s64
      %p71 = scmp.eq.s32.totalorder %s33, 3
      %p72 = por %p70, %p71
      %p73 = scmp.ne.s32.totalorder %s64, %s65
      %p74 = scmp.eq.s32.totalorder %s33, 0
      %p75 = por %p73, %p74
      %p76 = scmp.ne.s32.totalorder %s64, %s65
      %p77 = scmp.eq.s32.totalorder %s34, 3
      %p78 = por %p76, %p77
      %p80 = scmp.ne.s32.totalorder %s65, %s79
      %p81 = scmp.eq.s32.totalorder %s34, 0
      %p82 = por %p80, %p81
      %s84 = sadd.s32 %s83, 1
      %p87 = scmp.eq.s32.totalorder %s28, 3
      %p88 = scmp.ne.s32.totalorder %s83, %s85
      %p89 = scmp.eq.s32.totalorder %s28, 0
      %p90 = por %p88, %p89
      %p91 = scmp.ne.s32.totalorder %s83, %s85
      %p92 = scmp.eq.s32.totalorder %s33, 3
      %p93 = por %p91, %p92
      %p94 = scmp.ne.s32.totalorder %s85, %s86
      %p95 = scmp.eq.s32.totalorder %s33, 0
      %p96 = por %p94, %p95
      %p97 = scmp.ne.s32.totalorder %s85, %s86
      %p98 = scmp.eq.s32.totalorder %s34, 3
      %p99 = por %p97, %p98
      %p101 = scmp.ne.s32.totalorder %s86, %s100
      %p102 = scmp.eq.s32.totalorder %s34, 0
      %p103 = por %p101, %p102
      %s105 = sadd.s32 %s104, 1
      %p108 = scmp.eq.s32.totalorder %s28, 3
      %p109 = scmp.ne.s32.totalorder %s104, %s106
      %p110 = scmp.eq.s32.totalorder %s28, 0
      %p111 = por %p109, %p110
      %p112 = scmp.ne.s32.totalorder %s104, %s106
      %p113 = scmp.eq.s32.totalorder %s33, 3
      %p114 = por %p112, %p113
      %p115 = scmp.ne.s32.totalorder %s106, %s107
      %p116 = scmp.eq.s32.totalorder %s33, 0
      %p117 = por %p115, %p116
      %p118 = scmp.ne.s32.totalorder %s106, %s107
      %p119 = scmp.eq.s32.totalorder %s34, 3
      %p120 = por %p118, %p119
      %p122 = scmp.ne.s32.totalorder %s107, %s121
      %p123 = scmp.eq.s32.totalorder %s34, 0
      %p124 = por %p122, %p123
      %s126 = sadd.s32 %s125, 1
      %p129 = scmp.eq.s32.totalorder %s28, 3
      %p130 = scmp.ne.s32.totalorder %s125, %s127
      %p131 = scmp.eq.s32.totalorder %s28, 0
      %p132 = por %p130, %p131
      %p133 = scmp.ne.s32.totalorder %s125, %s127
      %p134 = scmp.eq.s32.totalorder %s33, 3
      %p135 = por %p133, %p134
      %p136 = scmp.ne.s32.totalorder %s127, %s128
      %p137 = scmp.eq.s32.totalorder %s33, 0
      %p138 = por %p136, %p137
      %p139 = scmp.ne.s32.totalorder %s127, %s128
      %p140 = scmp.eq.s32.totalorder %s34, 3
      %p141 = por %p139, %p140
      %p143 = scmp.ne.s32.totalorder %s128, %s142
      %p144 = scmp.eq.s32.totalorder %s34, 0
      %p145 = por %p143, %p144
      %s146 = ssub.s32 %s28, %s35
      %p147 = scmp.eq.s32.totalorder %s146, 0
      %s149 = sadd.s32 %s148, 1
      %s150 = scalar_select %p147, %s148, %s149
      %p153 = pneg %p147
      %p154 = scmp.eq.s32.totalorder %s28, 3
      %p155 = por %p153, %p154
      %p156 = scmp.ne.s32.totalorder %s148, %s151
      %p157 = scmp.eq.s32.totalorder %s28, 0
      %p158 = por %p156, %p157
      %p159 = scmp.ne.s32.totalorder %s148, %s151
      %p160 = scmp.eq.s32.totalorder %s33, 3
      %p161 = por %p159, %p160
      %p162 = scmp.ne.s32.totalorder %s151, %s152
      %p163 = scmp.eq.s32.totalorder %s33, 0
      %p164 = por %p162, %p163
      %p165 = scmp.ne.s32.totalorder %s151, %s152
      %p166 = scmp.eq.s32.totalorder %s34, 3
      %p167 = por %p165, %p166
      %p169 = scmp.ne.s32.totalorder %s152, %s168
      %p170 = scmp.eq.s32.totalorder %s34, 0
      %p171 = por %p169, %p170
      %s172 = ssub.s32 %s28, %s35
      %p173 = scmp.eq.s32.totalorder %s172, 0
      %s175 = sadd.s32 %s174, 1
      %s176 = scalar_select %p173, %s174, %s175
      %p179 = pneg %p173
      %p180 = scmp.eq.s32.totalorder %s28, 3
      %p181 = por %p179, %p180
      %p182 = scmp.ne.s32.totalorder %s174, %s177
      %p183 = scmp.eq.s32.totalorder %s28, 0
      %p184 = por %p182, %p183
      %p185 = scmp.ne.s32.totalorder %s174, %s177
      %p186 = scmp.eq.s32.totalorder %s33, 3
      %p187 = por %p185, %p186
      %p188 = scmp.ne.s32.totalorder %s177, %s178
      %p189 = scmp.eq.s32.totalorder %s33, 0
      %p190 = por %p188, %p189
      %p191 = scmp.ne.s32.totalorder %s177, %s178
      %p192 = scmp.eq.s32.totalorder %s34, 3
      %p193 = por %p191, %p192
      %p195 = scmp.ne.s32.totalorder %s178, %s194
      %p196 = scmp.eq.s32.totalorder %s34, 0
      %p197 = por %p195, %p196
      %s198 = ssub.s32 %s28, %s35
      %p199 = scmp.eq.s32.totalorder %s198, 0
      %s201 = sadd.s32 %s200, 1
      %s202 = scalar_select %p199, %s200, %s201
      %p205 = pneg %p199
      %p206 = scmp.eq.s32.totalorder %s28, 3
      %p207 = por %p205, %p206
      %p208 = scmp.ne.s32.totalorder %s200, %s203
      %p209 = scmp.eq.s32.totalorder %s28, 0
      %p210 = por %p208, %p209
      %p211 = scmp.ne.s32.totalorder %s200, %s203
      %p212 = scmp.eq.s32.totalorder %s33, 3
      %p213 = por %p211, %p212
      %p214 = scmp.ne.s32.totalorder %s203, %s204
      %p215 = scmp.eq.s32.totalorder %s33, 0
      %p216 = por %p214, %p215
      %p217 = scmp.ne.s32.totalorder %s203, %s204
      %p218 = scmp.eq.s32.totalorder %s34, 3
      %p219 = por %p217, %p218
      %p221 = scmp.ne.s32.totalorder %s204, %s220
      %p222 = scmp.eq.s32.totalorder %s34, 0
      %p223 = por %p221, %p222
      %s224 = ssub.s32 %s28, %s35
      %p225 = scmp.eq.s32.totalorder %s224, 0
      %s227 = sadd.s32 %s226, 1
      %s228 = scalar_select %p225, %s226, %s227
      %p231 = pneg %p225
      %p232 = scmp.eq.s32.totalorder %s28, 3
      %p233 = por %p231, %p232
      %p234 = scmp.ne.s32.totalorder %s226, %s229
      %p235 = scmp.eq.s32.totalorder %s28, 0
      %p236 = por %p234, %p235
      %p237 = scmp.ne.s32.totalorder %s226, %s229
      %p238 = scmp.eq.s32.totalorder %s33, 3
      %p239 = por %p237, %p238
      %p240 = scmp.ne.s32.totalorder %s229, %s230
      %p241 = scmp.eq.s32.totalorder %s33, 0
      %p242 = por %p240, %p241
      %p243 = scmp.ne.s32.totalorder %s229, %s230
      %p244 = scmp.eq.s32.totalorder %s34, 3
      %p245 = por %p243, %p244
      %p247 = scmp.ne.s32.totalorder %s230, %s246
      %p248 = scmp.eq.s32.totalorder %s34, 0
      %p249 = por %p247, %p248
      %p250 = scmp.le.s32.totalorder 1, %s28
      %p251 = scmp.lt.s32.totalorder %s28, 5
      %p252 = pnand %p250, %p251
      %p253 = pneg %p252
      // Predicated region
      $region9: #{tpu_custom_call.1} parent=5 // pred_check
        _
      $region10: #{tpu_custom_call.1} parent=5 // pred_check_branch
        %255 = sbr.rel (%p252) target = $region12
      $region11: #{tpu_custom_call.1} parent=5 // pred_region
        %s256 = ssub.s32 %s28, 1
        // Predicated region
        $region13: #{tpu_custom_call.1} parent=11 // pred_check
          %p257 = pneg %p75
        $region14: #{tpu_custom_call.1} parent=11 // pred_check_branch
          %259 = sbr.rel (%p257) target = $region16
        $region15: #{tpu_custom_call.1} parent=11 // pred_region
          %s261 = ssub.s32 256, 256
          %262 = vsyncadd [#allocation6], %s261
          %s263 = sshll.u32 [#allocation5], 4
          %s264 = int_to_ptr.vmem [resolvable:$true] %s263
          %269 = dma.hbm_to_vmem [thread:$0]  %s1, 256, %s264, [#allocation6], 128, 128, 8
        $region16: #{tpu_custom_call.1} parent=11 // pred_fallthru
          _
        // Predicated region
        $region17: #{tpu_custom_call.1} parent=11 // pred_check
          %p270 = pneg %p96
        $region18: #{tpu_custom_call.1} parent=11 // pred_check_branch
          %272 = sbr.rel (%p270) target = $region20
        $region19: #{tpu_custom_call.1} parent=11 // pred_region
          _
        $region20: #{tpu_custom_call.1} parent=11 // pred_fallthru
          _
        // Predicated region
        $region21: #{tpu_custom_call.1} parent=11 // pred_check
          %p273 = pneg %p117
        $region22: #{tpu_custom_call.1} parent=11 // pred_check_branch
          %275 = sbr.rel (%p273) target = $region24
        $region23: #{tpu_custom_call.1} parent=11 // pred_region
          %s277 = ssub.s32 512, 512
          %278 = vsyncadd [#allocation6], %s277
          %s279 = sshll.u32 [#allocation7], 4
          %s280 = int_to_ptr.vmem [resolvable:$true] %s279
          %285 = dma.hbm_to_vmem [thread:$0]  %s3, 512, %s280, [#allocation6], 128, 128, 8
        $region24: #{tpu_custom_call.1} parent=11 // pred_fallthru
          _
        // Predicated region
        $region25: #{tpu_custom_call.1} parent=11 // pred_check
          %p286 = pneg %p138
        $region26: #{tpu_custom_call.1} parent=11 // pred_check_branch
          %288 = sbr.rel (%p286) target = $region28
        $region27: #{tpu_custom_call.1} parent=11 // pred_region
          _
        $region28: #{tpu_custom_call.1} parent=11 // pred_fallthru
          _
      $region12: #{tpu_custom_call.1} parent=5 // pred_fallthru
        _
      %p289 = scmp.lt.s32.totalorder %s28, 4
      // Predicated region
      $region29: #{tpu_custom_call.1} parent=5 // pred_check
        %p290 = pneg %p289
      $region30: #{tpu_custom_call.1} parent=5 // pred_check_branch
        %292 = sbr.rel (%p290) target = $region32
      $region31: #{tpu_custom_call.1} parent=5 // pred_region
        // Predicated region
        $region33: #{tpu_custom_call.1} parent=31 // pred_check
          %p293 = pneg %p48
        $region34: #{tpu_custom_call.1} parent=31 // pred_check_branch
          %295 = sbr.rel (%p293) target = $region36
        $region35: #{tpu_custom_call.1} parent=31 // pred_region
          %s296 = sand.u32 %s38, 1
          %s297 = scalar_lea.sflag [#allocation3], %s296
          %s298 = sand.u32 %s38, 1
          %s299 = smul.addr %s298, 8
          %s300 = scalar_lea.vmem [#allocation2], %s299
          %s302 = ssub.s32 128, 128
          %303 = vsyncadd %s297, %s302
          %s304 = smul.addr %s28, 128
          %s305 = scalar_lea.hbm %s0, %s304
          %s307 = sshll.u32 %s300, 4
          %s308 = int_to_ptr.vmem [resolvable:$true] %s307
          %310 = dma.hbm_to_vmem [thread:$0]  %s305, 128, %s308, %s297
        $region36: #{tpu_custom_call.1} parent=31 // pred_fallthru
          _
        // Predicated region
        $region37: #{tpu_custom_call.1} parent=31 // pred_check
          %p311 = pneg %p158
        $region38: #{tpu_custom_call.1} parent=31 // pred_check_branch
          %313 = sbr.rel (%p311) target = $region40
        $region39: #{tpu_custom_call.1} parent=31 // pred_region
          %s314 = sand.u32 %s148, 1
          %s315 = scalar_lea.sflag [#allocation9], %s314
          %s316 = sand.u32 %s148, 1
          %s317 = smul.addr %s316, 8
          %s318 = scalar_lea.vmem [#allocation8], %s317
          %s320 = ssub.s32 128, 128
          %321 = vsyncadd %s315, %s320
          %s322 = smul.addr %s28, 128
          %s323 = scalar_lea.hbm %s5, %s322
          %s325 = sshll.u32 %s318, 4
          %s326 = int_to_ptr.vmem [resolvable:$true] %s325
          %328 = dma.hbm_to_vmem [thread:$0]  %s323, 128, %s326, %s315
        $region40: #{tpu_custom_call.1} parent=31 // pred_fallthru
          _
      $region32: #{tpu_custom_call.1} parent=5 // pred_fallthru
        _
      %p329 = scmp.le.s32.totalorder 1, %s28
      %p330 = scmp.lt.s32.totalorder %s28, 5
      %p331 = pnand %p329, %p330
      %p332 = pneg %p331
      // Predicated region
      $region41: #{tpu_custom_call.1} parent=5 // pred_check
        _
      $region42: #{tpu_custom_call.1} parent=5 // pred_check_branch
        %334 = sbr.rel (%p331) target = $region44
      $region43: #{tpu_custom_call.1} parent=5 // pred_region
        %s335 = ssub.s32 %s28, 1
        %s336 = sand.u32 %s41, 1
        %s337 = scalar_lea.sflag [#allocation3], %s336
        %s338 = sand.u32 %s41, 1
        %s339 = smul.addr %s338, 8
        %s340 = scalar_lea.vmem [#allocation2], %s339
        // Predicated region
        $region45: #{tpu_custom_call.1} parent=43 // pred_check
          %p341 = pneg %p54
        $region46: #{tpu_custom_call.1} parent=43 // pred_check_branch
          %343 = sbr.rel (%p341) target = $region48
        $region47: #{tpu_custom_call.1} parent=43 // pred_region
          %344 = dma.done %s337, 128
        $region48: #{tpu_custom_call.1} parent=43 // pred_fallthru
          _
        // Predicated region
        $region49: #{tpu_custom_call.1} parent=43 // pred_check
          %p345 = pneg %p75
        $region50: #{tpu_custom_call.1} parent=43 // pred_check_branch
          %347 = sbr.rel (%p345) target = $region52
        $region51: #{tpu_custom_call.1} parent=43 // pred_region
          %348 = dma.done [#allocation6], 256
        $region52: #{tpu_custom_call.1} parent=43 // pred_fallthru
          _
        // Predicated region
        $region53: #{tpu_custom_call.1} parent=43 // pred_check
          %p349 = pneg %p117
        $region54: #{tpu_custom_call.1} parent=43 // pred_check_branch
          %351 = sbr.rel (%p349) target = $region56
        $region55: #{tpu_custom_call.1} parent=43 // pred_region
          %352 = dma.done [#allocation6], 512
        $region56: #{tpu_custom_call.1} parent=43 // pred_fallthru
          _
        %s353 = sand.u32 %s151, 1
        %s354 = scalar_lea.sflag [#allocation9], %s353
        %s355 = sand.u32 %s151, 1
        %s356 = smul.addr %s355, 8
        %s357 = scalar_lea.vmem [#allocation8], %s356
        // Predicated region
        $region57: #{tpu_custom_call.1} parent=43 // pred_check
          %p358 = pneg %p164
        $region58: #{tpu_custom_call.1} parent=43 // pred_check_branch
          %360 = sbr.rel (%p358) target = $region60
        $region59: #{tpu_custom_call.1} parent=43 // pred_region
          %361 = dma.done %s354, 128
        $region60: #{tpu_custom_call.1} parent=43 // pred_fallthru
          _
        %s362 = sand.u32 %s41, 1
        %s363 = scalar_lea.sflag [#allocation3], %s362
        %s364 = sand.u32 %s41, 1
        %s365 = smul.addr %s364, 8
        %s366 = scalar_lea.vmem [#allocation2], %s365
        %p367 = pneg %p54
        %p368 = pneg %p51
        %p369 = pneg %p75
        %p370 = pneg %p72
        %p371 = pneg %p96
        %p372 = pneg %p93
        %p373 = pneg %p117
        %p374 = pneg %p114
        %p375 = pneg %p138
        %p376 = pneg %p135
        %s377 = sand.u32 %s151, 1
        %s378 = scalar_lea.sflag [#allocation9], %s377
        %s379 = sand.u32 %s151, 1
        %s380 = smul.addr %s379, 8
        %s381 = scalar_lea.vmem [#allocation8], %s380
        %p382 = pneg %p164
        %p383 = pneg %p161
        %p384 = pneg %p190
        %p385 = pneg %p187
        %s386 = sand.u32 %s177, 1
        %s387 = scalar_lea.sflag [#allocation4], %s386
        %s388 = sand.u32 %s177, 1
        %s389 = smul.addr %s388, 8
        %s390 = scalar_lea.vmem [#allocation10], %s389
        %p391 = pneg %p216
        %p392 = pneg %p213
        %s393 = sand.u32 %s33, 1
        %s394 = scalar_lea.sflag [#allocation12], %s393
        %s395 = sand.u32 %s203, 1
        %s396 = smul.addr %s395, 8
        %s397 = scalar_lea.vmem [#allocation11], %s396
        %p398 = pneg %p242
        %p399 = pneg %p239
        %s400 = sand.u32 %s33, 1
        %s401 = scalar_lea.sflag [#allocation12], %s400
        %s402 = sand.u32 %s229, 1
        %s403 = smul.addr %s402, 8
        %s404 = scalar_lea.vmem [#allocation13], %s403
        %v405 = vld [vmem:[%s340] sm:$0xff]
        %v406 = vld [vmem:[#allocation5] sm:$0xff]
        %v407 = vld [vmem:[#allocation5 + $0x8] sm:$0xff]
        %v408 = vld [vmem:[%s2] sm:$0x1]
        %v410 = vlaneseq
        %v411 = vshrl.u32 %v410, 7
        %v412 = vsub.s32 0, %v411
        %v413 = vrot.slane %v408, %v412
        %vm415 = vcmask 130048
        %v417 = vsel %vm415, %v405, 0
        %419 = vmatprep.subr.mxu0 0.0
        %420 = vmatpush1.msra.mxu0 %v406
        %421 = vmatprep.subr.mxu0 0.0
        %422 = vmatpush1.msra.mxu0 %v407
        %423 = vmatprep.subr.mxu0 0.0
        %424 = vmatpush1.msra.mxu0 0.0
        %425 = vmatprep.subr.mxu0 0.0
        %426 = vmatpush1.msra.mxu0 0.0
        %427 = vmatprep.subr.mxu0 0.0
        %428 = vmatpush1.msra.mxu0 0.0
        %429 = vmatprep.subr.mxu0 0.0
        %430 = vmatpush1.msra.mxu0 0.0
        %431 = vmatprep.subr.mxu0 0.0
        %432 = vmatpush1.msra.mxu0 0.0
        %433 = vmatprep.subr.mxu0 0.0
        %434 = vmatpush1.msra.mxu0 0.0
        %435 = vmatprep.subr.mxu0 0.0
        %436 = vmatpush1.msra.mxu0 0.0
        %437 = vmatprep.subr.mxu0 0.0
        %438 = vmatpush1.msra.mxu0 0.0
        %439 = vmatprep.subr.mxu0 0.0
        %440 = vmatpush1.msra.mxu0 0.0
        %441 = vmatprep.subr.mxu0 0.0
        %442 = vmatpush1.msra.mxu0 0.0
        %443 = vmatprep.subr.mxu0 0.0
        %444 = vmatpush1.msra.mxu0 0.0
        %445 = vmatprep.subr.mxu0 0.0
        %446 = vmatpush1.msra.mxu0 0.0
        %447 = vmatprep.subr.mxu0 0.0
        %448 = vmatpush1.msra.mxu0 0.0
        %449 = vmatprep.subr.mxu0 0.0
        %450 = vmatpush1.msra.mxu0 0.0
        %451 = vmatprep.subr.mxu0 0.0
        %452 = vmatpush1.msra.mxu0 0.0
        %453 = vmatprep.subr.mxu0 0.0
        %454 = vmatpush1.msra.mxu0 0.0
        %455 = vmatprep.subr.mxu0 0.0
        %456 = vmatpush1.msra.mxu0 0.0
        %457 = vmatprep.subr.mxu0 0.0
        %458 = vmatpush1.msra.mxu0 0.0
        %459 = vmatprep.subr.mxu0 0.0
        %460 = vmatpush1.msra.mxu0 0.0
        %461 = vmatprep.subr.mxu0 0.0
        %462 = vmatpush1.msra.mxu0 0.0
        %463 = vmatprep.subr.mxu0 0.0
        %464 = vmatpush1.msra.mxu0 0.0
        %465 = vmatprep.subr.mxu0 0.0
        %466 = vmatpush1.msra.mxu0 0.0
        %467 = vmatprep.subr.mxu0 0.0
        %468 = vmatpush1.msra.mxu0 0.0
        %469 = vmatprep.subr.mxu0 0.0
        %470 = vmatpush1.msra.mxu0 0.0
        %471 = vmatprep.subr.mxu0 0.0
        %472 = vmatpush1.msra.mxu0 0.0
        %473 = vmatprep.subr.mxu0 0.0
        %474 = vmatpush1.msra.mxu0 0.0
        %475 = vmatprep.subr.mxu0 0.0
        %476 = vmatpush1.msra.mxu0 0.0
        %477 = vmatprep.subr.mxu0 0.0
        %478 = vmatpush1.msra.mxu0 0.0
        %479 = vmatprep.subr.mxu0 0.0
        %480 = vmatpush1.msra.mxu0 0.0
        %481 = vmatprep.subr.mxu0 0.0
        %482 = vmatpush1.msra.mxu0 0.0
        %483 = vmatprep.mubr.f32.mxu0 0.0
        %484 = vmatmul.mubr.f32.gmra.mrb[0].mxu0 %v417
        %v485 = vpop.f32.mrb[0].mxu0
        %v486 = vadd.f32 %v413, %v485
        %v487 = vpop.f32.mrb[0].mxu0
        %488 = vdwg.mxu0
        %v489 = vmax.f32 %v486, 0.0
        %v490 = vld [vmem:[#allocation7] sm:$0xff]
        %v491 = vld [vmem:[#allocation7 + $0x8] sm:$0xff]
        %v492 = vld [vmem:[#allocation7 + $0x10] sm:$0xff]
        %v493 = vld [vmem:[#allocation7 + $0x18] sm:$0xff]
        %v494 = vld [vmem:[%s4] sm:$0x1]
        %v496 = vlaneseq
        %v497 = vshrl.u32 %v496, 7
        %v498 = vsub.s32 0, %v497
        %v499 = vrot.slane %v494, %v498
        %vm501 = vcmask 261120
        %v503 = vsel %vm501, %v489, 0
        %505 = vmatprep.subr.mxu0 0.0
        %506 = vmatpush1.msra.mxu0 %v490
        %507 = vmatprep.subr.mxu0 0.0
        %508 = vmatpush1.msra.mxu0 %v491
        %509 = vmatprep.subr.mxu0 0.0
        %510 = vmatpush1.msra.mxu0 %v492
        %511 = vmatprep.subr.mxu0 0.0
        %512 = vmatpush1.msra.mxu0 %v493
        %513 = vmatprep.subr.mxu0 0.0
        %514 = vmatpush1.msra.mxu0 0.0
        %515 = vmatprep.subr.mxu0 0.0
        %516 = vmatpush1.msra.mxu0 0.0
        %517 = vmatprep.subr.mxu0 0.0
        %518 = vmatpush1.msra.mxu0 0.0
        %519 = vmatprep.subr.mxu0 0.0
        %520 = vmatpush1.msra.mxu0 0.0
        %521 = vmatprep.subr.mxu0 0.0
        %522 = vmatpush1.msra.mxu0 0.0
        %523 = vmatprep.subr.mxu0 0.0
        %524 = vmatpush1.msra.mxu0 0.0
        %525 = vmatprep.subr.mxu0 0.0
        %526 = vmatpush1.msra.mxu0 0.0
        %527 = vmatprep.subr.mxu0 0.0
        %528 = vmatpush1.msra.mxu0 0.0
        %529 = vmatprep.subr.mxu0 0.0
        %530 = vmatpush1.msra.mxu0 0.0
        %531 = vmatprep.subr.mxu0 0.0
        %532 = vmatpush1.msra.mxu0 0.0
        %533 = vmatprep.subr.mxu0 0.0
        %534 = vmatpush1.msra.mxu0 0.0
        %535 = vmatprep.subr.mxu0 0.0
        %536 = vmatpush1.msra.mxu0 0.0
        %537 = vmatprep.subr.mxu0 0.0
        %538 = vmatpush1.msra.mxu0 0.0
        %539 = vmatprep.subr.mxu0 0.0
        %540 = vmatpush1.msra.mxu0 0.0
        %541 = vmatprep.subr.mxu0 0.0
        %542 = vmatpush1.msra.mxu0 0.0
        %543 = vmatprep.subr.mxu0 0.0
        %544 = vmatpush1.msra.mxu0 0.0
        %545 = vmatprep.subr.mxu0 0.0
        %546 = vmatpush1.msra.mxu0 0.0
        %547 = vmatprep.subr.mxu0 0.0
        %548 = vmatpush1.msra.mxu0 0.0
        %549 = vmatprep.subr.mxu0 0.0
        %550 = vmatpush1.msra.mxu0 0.0
        %551 = vmatprep.subr.mxu0 0.0
        %552 = vmatpush1.msra.mxu0 0.0
        %553 = vmatprep.subr.mxu0 0.0
        %554 = vmatpush1.msra.mxu0 0.0
        %555 = vmatprep.subr.mxu0 0.0
        %556 = vmatpush1.msra.mxu0 0.0
        %557 = vmatprep.subr.mxu0 0.0
        %558 = vmatpush1.msra.mxu0 0.0
        %559 = vmatprep.subr.mxu0 0.0
        %560 = vmatpush1.msra.mxu0 0.0
        %561 = vmatprep.subr.mxu0 0.0
        %562 = vmatpush1.msra.mxu0 0.0
        %563 = vmatprep.subr.mxu0 0.0
        %564 = vmatpush1.msra.mxu0 0.0
        %565 = vmatprep.subr.mxu0 0.0
        %566 = vmatpush1.msra.mxu0 0.0
        %567 = vmatprep.subr.mxu0 0.0
        %568 = vmatpush1.msra.mxu0 0.0
        %569 = vmatprep.mubr.f32.mxu0 0.0
        %570 = vmatmul.mubr.f32.gmra.mrb[0].mxu0 %v503
        %v571 = vpop.f32.mrb[0].mxu0
        %v572 = vadd.f32 %v499, %v571
        %v573 = vpop.f32.mrb[0].mxu0
        %574 = vdwg.mxu0
        %v575 = vmul.f32 %v572, 1.442695
        %v576 = vpow.pop %v575
        %v577 = vmul.f32 %v572, 0.5
        %v578 = vmul.f32 %v577, 1.442695
        %v579 = vpow.pop %v578
        %v580 = vld [vmem:[%s357] sm:$0xff]
        %582 = vrot.lane.b32.xlu0 %v580, 16
        %v583 = vpop.permute.xlu0 %582
        %v585 = vmul.f32 %v579, %v583
        %587 = vrot.lane.b32.xlu0 %v585, 112
        %v588 = vpop.permute.xlu0 %587
        %v590 = vadd.f32 %v572, %v588
        %v591 = vsel %vm415, %v590, -inf
        %v592 = vrot.slane %v591, 4
        %v593 = vmax.f32 %v591, %v592
        %v594 = vrot.slane %v593, 2
        %v595 = vmax.f32 %v593, %v594
        %v596 = vrot.slane %v595, 1
        %v597 = vmax.f32 %v595, %v596
        %v598 = vsub.f32 %v590, %v597
        %v599 = vmul.f32 %v598, 1.442695
        %v600 = vpow.pop %v599
        %v601 = vsel %vm415, %v600, 0.0
        %v602 = vrot.slane %v601, 4
        %v603 = vadd.f32 %v601, %v602
        %v604 = vrot.slane %v603, 2
        %v605 = vadd.f32 %v603, %v604
        %v606 = vrot.slane %v605, 1
        %v607 = vadd.f32 %v605, %v606
        %v608 = vrcp.pop %v607
        %v609 = vmul.f32 %v600, %v608
        %v611 = vsel %vm415, %v609, 0
        %613 = vmatprep.subr.mxu0 0.0
        %614 = vmatpush1.xpose.msra.mxu0 %v611
        %615 = vmatprep.subr.mxu0 0.0
        %616 = vmatpush1.xpose.msra.mxu0 0.0
        %617 = vmatprep.subr.mxu0 0.0
        %618 = vmatpush1.xpose.msra.mxu0 0.0
        %619 = vmatprep.subr.mxu0 0.0
        %620 = vmatpush1.xpose.msra.mxu0 0.0
        %621 = vmatprep.subr.mxu0 0.0
        %622 = vmatpush1.xpose.msra.mxu0 0.0
        %623 = vmatprep.subr.mxu0 0.0
        %624 = vmatpush1.xpose.msra.mxu0 0.0
        %625 = vmatprep.subr.mxu0 0.0
        %626 = vmatpush1.xpose.msra.mxu0 0.0
        %627 = vmatprep.subr.mxu0 0.0
        %628 = vmatpush1.xpose.msra.mxu0 0.0
        %629 = vmatprep.subr.mxu0 0.0
        %630 = vmatpush1.xpose.msra.mxu0 0.0
        %631 = vmatprep.subr.mxu0 0.0
        %632 = vmatpush1.xpose.msra.mxu0 0.0
        %633 = vmatprep.subr.mxu0 0.0
        %634 = vmatpush1.xpose.msra.mxu0 0.0
        %635 = vmatprep.subr.mxu0 0.0
        %636 = vmatpush1.xpose.msra.mxu0 0.0
        %637 = vmatprep.subr.mxu0 0.0
        %638 = vmatpush1.xpose.msra.mxu0 0.0
        %639 = vmatprep.subr.mxu0 0.0
        %640 = vmatpush1.xpose.msra.mxu0 0.0
        %641 = vmatprep.subr.mxu0 0.0
        %642 = vmatpush1.xpose.msra.mxu0 0.0
        %643 = vmatprep.subr.mxu0 0.0
        %644 = vmatpush1.xpose.msra.mxu0 0.0
        %645 = vmatprep.subr.mxu0 0.0
        %646 = vmatpush1.xpose.msra.mxu0 0.0
        %647 = vmatprep.subr.mxu0 0.0
        %648 = vmatpush1.xpose.msra.mxu0 0.0
        %649 = vmatprep.subr.mxu0 0.0
        %650 = vmatpush1.xpose.msra.mxu0 0.0
        %651 = vmatprep.subr.mxu0 0.0
        %652 = vmatpush1.xpose.msra.mxu0 0.0
        %653 = vmatprep.subr.mxu0 0.0
        %654 = vmatpush1.xpose.msra.mxu0 0.0
        %655 = vmatprep.subr.mxu0 0.0
        %656 = vmatpush1.xpose.msra.mxu0 0.0
        %657 = vmatprep.subr.mxu0 0.0
        %658 = vmatpush1.xpose.msra.mxu0 0.0
        %659 = vmatprep.subr.mxu0 0.0
        %660 = vmatpush1.xpose.msra.mxu0 0.0
        %661 = vmatprep.subr.mxu0 0.0
        %662 = vmatpush1.xpose.msra.mxu0 0.0
        %663 = vmatprep.subr.mxu0 0.0
        %664 = vmatpush1.xpose.msra.mxu0 0.0
        %665 = vmatprep.subr.mxu0 0.0
        %666 = vmatpush1.xpose.msra.mxu0 0.0
        %667 = vmatprep.subr.mxu0 0.0
        %668 = vmatpush1.xpose.msra.mxu0 0.0
        %669 = vmatprep.subr.mxu0 0.0
        %670 = vmatpush1.xpose.msra.mxu0 0.0
        %671 = vmatprep.subr.mxu0 0.0
        %672 = vmatpush1.xpose.msra.mxu0 0.0
        %673 = vmatprep.subr.mxu0 0.0
        %674 = vmatpush1.xpose.msra.mxu0 0.0
        %675 = vmatprep.subr.mxu0 0.0
        %676 = vmatpush1.xpose.msra.mxu0 0.0
        %677 = vmatprep.mubr.f32.mxu0 0.0
        %678 = vmatmul.mubr.f32.gmra.mrb[0].mxu0 %v611
        %v679 = vpop.f32.mrb[0].mxu0
        %v680 = vadd.f32 0.0, %v679
        %v681 = vpop.f32.mrb[0].mxu0
        %682 = vdwg.mxu0
        %v683 = vsub.f32 0.0, %v680
        %v684 = vmul.f32 %v683, 1.442695
        %v685 = vpow.pop %v684
        %v686 = vadd.f32 %v685, 1.0
        %v687 = vrcp.pop %v686
        %vm688 = vcmask 64512
        %689 = vst.msk [vmem:[%s390] sm:$0xff] %vm688, %v687
        %690 = vst.msk [vmem:[%s397] sm:$0xff] %vm415, %v572
        %692 = vrot.lane.b32.xlu0 %v576, 112
        %v693 = vpop.permute.xlu0 %692
        %695 = vst.msk [vmem:[%s404] sm:$0xff] %vm415, %v693
        %s696 = sand.u32 %s177, 1
        %s697 = scalar_lea.sflag [#allocation4], %s696
        %s698 = sand.u32 %s177, 1
        %s699 = smul.addr %s698, 8
        %s700 = scalar_lea.vmem [#allocation10], %s699
        %s701 = sand.u32 %s33, 1
        %s702 = scalar_lea.sflag [#allocation12], %s701
        %s703 = sand.u32 %s203, 1
        %s704 = smul.addr %s703, 8
        %s705 = scalar_lea.vmem [#allocation11], %s704
        %s706 = sand.u32 %s33, 1
        %s707 = scalar_lea.sflag [#allocation12], %s706
        %s708 = sand.u32 %s229, 1
        %s709 = smul.addr %s708, 8
        %s710 = scalar_lea.vmem [#allocation13], %s709
        // Predicated region
        $region61: #{tpu_custom_call.1} parent=43 // pred_check
          %p711 = pneg %p187
        $region62: #{tpu_custom_call.1} parent=43 // pred_check_branch
          %713 = sbr.rel (%p711) target = $region64
        $region63: #{tpu_custom_call.1} parent=43 // pred_region
          %s715 = ssub.s32 128, 128
          %716 = vsyncadd %s697, %s715
          %s717 = smul.addr %s33, 128
          %s718 = scalar_lea.hbm %s6, %s717
          %s720 = sshll.u32 %s700, 4
          %s721 = int_to_ptr.vmem [resolvable:$true] %s720
          %723 = dma.vmem_to_hbm [thread:$0]  %s721, 128, %s718, %s697
        $region64: #{tpu_custom_call.1} parent=43 // pred_fallthru
          _
        // Predicated region
        $region65: #{tpu_custom_call.1} parent=43 // pred_check
          %p724 = pneg %p213
        $region66: #{tpu_custom_call.1} parent=43 // pred_check_branch
          %726 = sbr.rel (%p724) target = $region68
        $region67: #{tpu_custom_call.1} parent=43 // pred_region
          %s728 = ssub.s32 128, 128
          %729 = vsyncadd %s702, %s728
          %s730 = smul.addr %s33, 128
          %s731 = scalar_lea.hbm %s7, %s730
          %s733 = sshll.u32 %s705, 4
          %s734 = int_to_ptr.vmem [resolvable:$true] %s733
          %736 = dma.vmem_to_hbm [thread:$0]  %s734, 128, %s731, %s702
        $region68: #{tpu_custom_call.1} parent=43 // pred_fallthru
          _
        // Predicated region
        $region69: #{tpu_custom_call.1} parent=43 // pred_check
          %p737 = pneg %p239
        $region70: #{tpu_custom_call.1} parent=43 // pred_check_branch
          %739 = sbr.rel (%p737) target = $region72
        $region71: #{tpu_custom_call.1} parent=43 // pred_region
          %s741 = ssub.s32 128, 128
          %742 = vsyncadd %s707, %s741
          %s743 = smul.addr %s33, 128
          %s744 = scalar_lea.hbm %s8, %s743
          %s746 = sshll.u32 %s710, 4
          %s747 = int_to_ptr.vmem [resolvable:$true] %s746
          %749 = dma.vmem_to_hbm [thread:$0]  %s747, 128, %s744, %s707
        $region72: #{tpu_custom_call.1} parent=43 // pred_fallthru
          _
      $region44: #{tpu_custom_call.1} parent=5 // pred_fallthru
        _
      %p750 = scmp.le.s32.totalorder 2, %s28
      // Predicated region
      $region73: #{tpu_custom_call.1} parent=5 // pred_check
        %p751 = pneg %p750
      $region74: #{tpu_custom_call.1} parent=5 // pred_check_branch
        %753 = sbr.rel (%p751) target = $region76
      $region75: #{tpu_custom_call.1} parent=5 // pred_region
        %s754 = ssub.s32 %s28, 2
        // Predicated region
        $region77: #{tpu_custom_call.1} parent=75 // pred_check
          %p755 = pneg %p193
        $region78: #{tpu_custom_call.1} parent=75 // pred_check_branch
          %757 = sbr.rel (%p755) target = $region80
        $region79: #{tpu_custom_call.1} parent=75 // pred_region
          %s758 = sand.u32 %s178, 1
          %s759 = scalar_lea.sflag [#allocation4], %s758
          %s760 = sand.u32 %s178, 1
          %s761 = smul.addr %s760, 8
          %s762 = scalar_lea.vmem [#allocation10], %s761
          %763 = dma.done %s759, 128
        $region80: #{tpu_custom_call.1} parent=75 // pred_fallthru
          _
        // Predicated region
        $region81: #{tpu_custom_call.1} parent=75 // pred_check
          %p764 = pneg %p219
        $region82: #{tpu_custom_call.1} parent=75 // pred_check_branch
          %766 = sbr.rel (%p764) target = $region84
        $region83: #{tpu_custom_call.1} parent=75 // pred_region
          %s767 = sand.u32 %s34, 1
          %s768 = scalar_lea.sflag [#allocation12], %s767
          %s769 = sand.u32 %s204, 1
          %s770 = smul.addr %s769, 8
          %s771 = scalar_lea.vmem [#allocation11], %s770
          %772 = dma.done %s768, 128
        $region84: #{tpu_custom_call.1} parent=75 // pred_fallthru
          _
        // Predicated region
        $region85: #{tpu_custom_call.1} parent=75 // pred_check
          %p773 = pneg %p245
        $region86: #{tpu_custom_call.1} parent=75 // pred_check_branch
          %775 = sbr.rel (%p773) target = $region88
        $region87: #{tpu_custom_call.1} parent=75 // pred_region
          %s776 = sand.u32 %s34, 1
          %s777 = scalar_lea.sflag [#allocation12], %s776
          %s778 = sand.u32 %s230, 1
          %s779 = smul.addr %s778, 8
          %s780 = scalar_lea.vmem [#allocation13], %s779
          %781 = dma.done %s777, 128
        $region88: #{tpu_custom_call.1} parent=75 // pred_fallthru
          _
      $region76: #{tpu_custom_call.1} parent=5 // pred_fallthru
        _
    $region6: #{tpu_custom_call.1} parent=1 // loop_footer
      %s32 = sadd.s32 1, %s28
    $region7: #{tpu_custom_call.1} parent=1 // loop_footer_branch
      %27 = sbr.rel target = $region3
    $region8: #{tpu_custom_call.1} parent=1 // loop_exit
      _
    %782 = vsyncpa [#allocation3], 1
    %s783 = scalar_lea.sflag [#allocation3], 1
    %784 = vsyncpa %s783, 1
    %785 = vsyncpa [#allocation6], 1
    %786 = vsyncpa [#allocation9], 1
    %s787 = scalar_lea.sflag [#allocation9], 1
    %788 = vsyncpa %s787, 1
    %789 = vsyncpa [#allocation4], 1
    %s790 = scalar_lea.sflag [#allocation4], 1
    %791 = vsyncpa %s790, 1
    %792 = vsyncpa [#allocation12], 1
    %s793 = scalar_lea.sflag [#allocation12], 1
    %794 = vsyncpa %s793, 1

</llo_original>
